<compile_context>
chip_gen: v7x
topology: tpu7x:2x2x1
jax: 0.10.0
libtpu: 0.0.40
codegen_flags: <defaults>
</compile_context>

<pallas_src>
import jax
import jax.numpy as jnp
from jax.experimental import pallas as pl
from jax.experimental.pallas import tpu as pltpu


# ----------------------------------------------------------------------------
# Pallas kernel: fused 1x1-conv (per-child matmuls) + BN + residual + ReLU
# ----------------------------------------------------------------------------
def _make_root_kernel(num_children, residual):
    def _contrib(w, x):
        # w: (Cout, Ck), x: (Ck, ts)  ->  (Cout, ts) f32
        ck = x.shape[0]
        if ck >= 8:
            return jnp.dot(w, x, preferred_element_type=jnp.float32)
        # tiny channel count: VPU broadcast-MAC (avoids a degenerate MXU matmul)
        acc = None
        for c in range(ck):
            t = (w[:, c:c + 1].astype(jnp.float32) *
                 x[c:c + 1, :].astype(jnp.float32))
            acc = t if acc is None else acc + t
        return acc

    def kernel(*refs):
        x_refs = refs[:num_children]                     # (1, Ck, ts) each
        w_refs = refs[num_children:2 * num_children]     # (Cout, Ck) each
        scale_ref = refs[2 * num_children]               # (Cout, 1) f32
        shift_ref = refs[2 * num_children + 1]           # (Cout, 1) f32
        o_ref = refs[2 * num_children + 2]               # (1, Cout, ts)

        y = _contrib(w_refs[0][...], x_refs[0][0, :, :])
        for k in range(1, num_children):
            y = y + _contrib(w_refs[k][...], x_refs[k][0, :, :])

        # BN (inference) in f32: y * scale + shift, per output channel (sublane)
        y = y * scale_ref[...] + shift_ref[...]

        if residual:
            # children[0] already has Cout channels; its tile is resident from
            # the matmul above -> no extra HBM traffic, f32 add.
            y = y + x_refs[0][0, :, :].astype(jnp.float32)

        o_ref[0, :, :] = jnp.maximum(y, 0.0).astype(o_ref.dtype)

    return kernel


# ----------------------------------------------------------------------------
# Wrapper
# ----------------------------------------------------------------------------
def root_forward(children_nchw, weight, gamma, beta, running_mean, running_var,
                 *, residual=True, eps=1e-5, out_dtype=None):
    """Root forward.

    children_nchw: list of NCHW arrays (channel counts sum to Cin).
    weight: (Cout, Cin, 1, 1).  Returns NCHW (N, Cout, H, W).
    """
    children_nchw = list(children_nchw)
    n, c0, h, w_sp = (int(d) for d in children_nchw[0].shape)
    cout, cin = int(weight.shape[0]), int(weight.shape[1])
    in_dtype = children_nchw[0].dtype
    for c in children_nchw:
        assert int(c.shape[0]) == n and int(c.shape[2]) == h and int(c.shape[3]) == w_sp
        assert c.dtype == in_dtype
    assert sum(int(c.shape[1]) for c in children_nchw) == cin
    if residual:
        assert c0 == cout, "residual requires children[0] channels == out_channels"

    out_dtype = jnp.dtype(out_dtype) if out_dtype is not None else jnp.dtype(in_dtype)
    s = h * w_sp

    # NCHW -> (N, Ck, S): metadata-only reshape, zero HBM traffic.
    xs = [c.reshape(n, int(c.shape[1]), s) for c in children_nchw]

    # Split the (Cout, Cin) weight by child channel ranges; weights follow the
    # activation dtype (tiny tensors, negligible traffic).
    w2d = weight.reshape(cout, cin)
    ws, off = [], 0
    for c in children_nchw:
        ck = int(c.shape[1])
        ws.append(w2d[:, off:off + ck].astype(in_dtype))
        off += ck

    # BN fold to f32 per-channel scale/shift, applied inside the kernel.
    scale = (gamma.astype(jnp.float32) /
             jnp.sqrt(running_var.astype(jnp.float32) + eps))            # (Cout,)
    shift = beta.astype(jnp.float32) - running_mean.astype(jnp.float32) * scale
    scale = scale.reshape(cout, 1)
    shift = shift.reshape(cout, 1)

    # ---- generation-aware VMEM budget / spatial tile --------------------------
    try:
        vmem_cap = int(pltpu.get_tpu_info().vmem_capacity_bytes)
    except Exception:
        vmem_cap = 64 << 20                       # conservative (v7x per-TC VMEM)
    # v5e/v6e (128 MiB): 96 MiB scoped limit; v7x (64 MiB): 40 MiB.
    vmem_limit = (96 << 20) if vmem_cap >= (100 << 20) else (40 << 20)

    in_b = jnp.dtype(in_dtype).itemsize
    out_b = out_dtype.itemsize
    resident = 2 * cout * cin * in_b + 4 * cout * 4        # weights + scale/shift (x2 buf)
    per_col = (2 * (cin * in_b + cout * out_b)             # double-buffered in/out tiles
               + 2 * cout * 4)                             # f32 matmul intermediates
    budget = int(0.70 * vmem_limit) - resident
    ts_cap = max(128, (budget // per_col) // 128 * 128)    # lane-aligned tile cap

    ts = s if s <= ts_cap else ts_cap                      # full-S block or 128-multiple
    # Keep >=4 total grid steps (>=2 per v7x TensorCore) when spatial allows it.
    min_steps = 4
    q = -(-min_steps // n)
    if q > 1:
        ts_split = (s // q) // 128 * 128
        if 128 <= ts_split < ts:
            ts = ts_split
    s_blocks = -(-s // ts)                                 # ragged last block OK
    grid = (n, s_blocks)

    in_specs = (
        [pl.BlockSpec((1, int(c.shape[1]), ts), lambda i, j: (i, 0, j))
         for c in children_nchw]                                        # child tiles
        + [pl.BlockSpec((cout, int(wk.shape[1])), lambda i, j: (0, 0))
           for wk in ws]                                                # weights (resident)
        + [pl.BlockSpec((cout, 1), lambda i, j: (0, 0)),                # BN scale
           pl.BlockSpec((cout, 1), lambda i, j: (0, 0))]                # BN shift
    )
    out_spec = pl.BlockSpec((1, cout, ts), lambda i, j: (i, 0, j))

    out = pl.pallas_call(
        _make_root_kernel(len(xs), residual),
        out_shape=jax.ShapeDtypeStruct((n, cout, s), out_dtype),
        grid_spec=pltpu.PrefetchScalarGridSpec(
            num_scalar_prefetch=0,
            grid=grid,
            in_specs=in_specs,
            out_specs=out_spec,
        ),
        compiler_params=pltpu.CompilerParams(
            dimension_semantics=("parallel", "parallel"),
            vmem_limit_bytes=vmem_limit,
        ),
    )(*xs, *ws, scale, shift)

    # (N, Cout, S) -> (N, Cout, H, W): metadata-only reshape, zero HBM traffic.
    return out.reshape(n, cout, h, w_sp)


# ----------------------------------------------------------------------------
# Pure-JAX reference for verification
# ----------------------------------------------------------------------------
def root_reference(children_nchw, weight, gamma, beta, running_mean, running_var,
                   *, residual=True, eps=1e-5):
    x = jnp.concatenate(children_nchw, axis=1)                 # (N, Cin, H, W)
    w2d = weight.reshape(weight.shape[0], -1)                  # (Cout, Cin)
    y = jnp.einsum('nchw,oc->nohw', x, w2d)
    inv = gamma / jnp.sqrt(running_var + eps)
    y = y * inv[None, :, None, None] + (beta - running_mean * inv)[None, :, None, None]
    if residual:
        y = y + children_nchw[0]
    return jnp.maximum(y, 0.0)


if __name__ == "__main__":
    key = jax.random.PRNGKey(0)
    ks = jax.random.split(key, 14)

    # ---- test 1: small channels (VPU-MAC path for the 4-ch child), residual,
    #              ragged last spatial block (S=400 -> 128-tiles) --------------
    N, H, W = 2, 20, 20
    C0, C1 = 8, 4
    Cin, Cout = C0 + C1, C0
    child0 = jax.random.normal(ks[0], (N, C0, H, W), jnp.float32)
    child1 = jax.random.normal(ks[1], (N, C1, H, W), jnp.float32)
    children = [child0, child1]
    weight = jax.random.normal(ks[2], (Cout, Cin, 1, 1), jnp.float32) * 0.1
    gamma = 1.0 + 0.1 * jax.random.normal(ks[3], (Cout,), jnp.float32)
    beta = 0.1 * jax.random.normal(ks[4], (Cout,), jnp.float32)
    rmean = 0.1 * jax.random.normal(ks[5], (Cout,), jnp.float32)
    rvar = jnp.abs(1.0 + 0.1 * jax.random.normal(ks[6], (Cout,), jnp.float32))

    out = jax.block_until_ready(
        root_forward(children, weight, gamma, beta, rmean, rvar, residual=True))
    ref = root_reference(children, weight, gamma, beta, rmean, rvar, residual=True)
    assert out.shape == (N, Cout, H, W), out.shape
    assert jnp.allclose(out, ref, atol=2e-3, rtol=2e-3), \
        float(jnp.max(jnp.abs(out - ref)))

    # bf16 activations (as produced upstream) -> half HBM read traffic on
    # v6e/v7x; accumulation, BN and residual stay f32 inside the kernel.
    children_bf = [c.astype(jnp.bfloat16) for c in children]
    out_bf = jax.block_until_ready(
        root_forward(children_bf, weight, gamma, beta, rmean, rvar,
                     residual=True, out_dtype=jnp.float32))
    ref_bf = root_reference([c.astype(jnp.float32) for c in children_bf],
                            weight, gamma, beta, rmean, rvar, residual=True)
    assert jnp.allclose(out_bf, ref_bf, atol=3e-2, rtol=3e-2), \
        float(jnp.max(jnp.abs(out_bf - ref_bf)))

    # ---- test 2: Cout=128 (MXU path), small spatial (full-dim lane block),
    #              residual=False ---------------------------------------------
    N2, H2, W2 = 1, 8, 8
    C0b, C1b, Coutb = 96, 64, 128
    ch0 = jax.random.normal(ks[7], (N2, C0b, H2, W2), jnp.float32)
    ch1 = jax.random.normal(ks[8], (N2, C1b, H2, W2), jnp.float32)
    w2 = jax.random.normal(ks[9], (Coutb, C0b + C1b, 1, 1), jnp.float32) * 0.05
    g2 = 1.0 + 0.1 * jax.random.normal(ks[10], (Coutb,), jnp.float32)
    b2 = 0.1 * jax.random.normal(ks[11], (Coutb,), jnp.float32)
    rm2 = 0.1 * jax.random.normal(ks[12], (Coutb,), jnp.float32)
    rv2 = jnp.abs(1.0 + 0.1 * jax.random.normal(ks[13], (Coutb,), jnp.float32))

    out2 = jax.block_until_ready(
        root_forward([ch0, ch1], w2, g2, b2, rm2, rv2, residual=False))
    ref2 = root_reference([ch0, ch1], w2, g2, b2, rm2, rv2, residual=False)
    assert out2.shape == (N2, Coutb, H2, W2), out2.shape
    assert jnp.allclose(out2, ref2, atol=2e-3, rtol=2e-3), \
        float(jnp.max(jnp.abs(out2 - ref2)))

    print("KERNEL_OK")
</pallas_src>

<mosaic_0001>
module attributes {stable_mosaic.version = 11 : i64} {
  func.func @kernel(%arg0: i32, %arg1: i32, %arg2: memref<1x8x128xf32, #tpu.memory_space<vmem>>, %arg3: memref<1x4x128xf32, #tpu.memory_space<vmem>>, %arg4: memref<8x8xf32, #tpu.memory_space<vmem>>, %arg5: memref<8x4xf32, #tpu.memory_space<vmem>>, %arg6: memref<8x1xf32, #tpu.memory_space<vmem>>, %arg7: memref<8x1xf32, #tpu.memory_space<vmem>>, %arg8: memref<1x8x128xf32, #tpu.memory_space<vmem>>) attributes {dimension_semantics = [#tpu.dimension_semantics<parallel>, #tpu.dimension_semantics<parallel>], iteration_bounds = array<i64: 2, 4>, scalar_prefetch = 0 : i64, scratch_operands = 0 : i64, tpu.core_type = #tpu.core_type<tc>, window_params = [{transform_indices = @transform_0, window_bounds = array<i64: 1, 8, 128>}, {transform_indices = @transform_1, window_bounds = array<i64: 1, 4, 128>}, {pipeline_mode = #tpu.pipeline_mode<synchronous>, transform_indices = @transform_2, window_bounds = array<i64: 8, 8>}, {pipeline_mode = #tpu.pipeline_mode<synchronous>, transform_indices = @transform_3, window_bounds = array<i64: 8, 4>}, {pipeline_mode = #tpu.pipeline_mode<synchronous>, transform_indices = @transform_4, window_bounds = array<i64: 8, 1>}, {pipeline_mode = #tpu.pipeline_mode<synchronous>, transform_indices = @transform_5, window_bounds = array<i64: 8, 1>}, {transform_indices = @transform_6, window_bounds = array<i64: 1, 8, 128>}]} {
    %c0 = arith.constant 0 : index
    %c0_0 = arith.constant 0 : index
    %0 = vector.load %arg4[%c0, %c0_0] : memref<8x8xf32, #tpu.memory_space<vmem>>, vector<8x8xf32>
    %c0_1 = arith.constant 0 : index
    %c0_2 = arith.constant 0 : index
    %c0_3 = arith.constant 0 : index
    %1 = vector.load %arg2[%c0_1, %c0_2, %c0_3] : memref<1x8x128xf32, #tpu.memory_space<vmem>>, vector<1x8x128xf32>
    %2 = vector.shape_cast %1 : vector<1x8x128xf32> to vector<8x128xf32>
    %cst = arith.constant dense<0.000000e+00> : vector<8x128xf32>
    %3 = tpu.matmul %0, %2, %cst {dimension_numbers = #tpu.dot_dimension_numbers<[1], [0], [0], [1], [0, 0, 1, 1], [], []>} : vector<8x8xf32>, vector<8x128xf32>, vector<8x128xf32> -> vector<8x128xf32>
    %c0_4 = arith.constant 0 : index
    %c0_5 = arith.constant 0 : index
    %4 = vector.load %arg5[%c0_4, %c0_5] : memref<8x4xf32, #tpu.memory_space<vmem>>, vector<8x4xf32>
    %c0_6 = arith.constant 0 : index
    %c0_7 = arith.constant 0 : index
    %c0_8 = arith.constant 0 : index
    %5 = vector.load %arg3[%c0_6, %c0_7, %c0_8] : memref<1x4x128xf32, #tpu.memory_space<vmem>>, vector<1x4x128xf32>
    %6 = vector.shape_cast %5 : vector<1x4x128xf32> to vector<4x128xf32>
    %7 = vector.extract_strided_slice %4 {offsets = [0, 0], sizes = [8, 1], strides = [1, 1]} : vector<8x4xf32> to vector<8x1xf32>
    %8 = vector.extract_strided_slice %6 {offsets = [0, 0], sizes = [1, 128], strides = [1, 1]} : vector<4x128xf32> to vector<1x128xf32>
    %9 = vector.broadcast %7 : vector<8x1xf32> to vector<8x128xf32>
    %10 = vector.broadcast %8 : vector<1x128xf32> to vector<8x128xf32>
    %11 = arith.mulf %9, %10 : vector<8x128xf32>
    %12 = vector.extract_strided_slice %4 {offsets = [0, 1], sizes = [8, 1], strides = [1, 1]} : vector<8x4xf32> to vector<8x1xf32>
    %13 = vector.extract_strided_slice %6 {offsets = [1, 0], sizes = [1, 128], strides = [1, 1]} : vector<4x128xf32> to vector<1x128xf32>
    %14 = vector.broadcast %12 : vector<8x1xf32> to vector<8x128xf32>
    %15 = vector.broadcast %13 : vector<1x128xf32> to vector<8x128xf32>
    %16 = arith.mulf %14, %15 : vector<8x128xf32>
    %17 = arith.addf %11, %16 : vector<8x128xf32>
    %18 = vector.extract_strided_slice %4 {offsets = [0, 2], sizes = [8, 1], strides = [1, 1]} : vector<8x4xf32> to vector<8x1xf32>
    %19 = vector.extract_strided_slice %6 {offsets = [2, 0], sizes = [1, 128], strides = [1, 1]} : vector<4x128xf32> to vector<1x128xf32>
    %20 = vector.broadcast %18 : vector<8x1xf32> to vector<8x128xf32>
    %21 = vector.broadcast %19 : vector<1x128xf32> to vector<8x128xf32>
    %22 = arith.mulf %20, %21 : vector<8x128xf32>
    %23 = arith.addf %17, %22 : vector<8x128xf32>
    %24 = vector.extract_strided_slice %4 {offsets = [0, 3], sizes = [8, 1], strides = [1, 1]} : vector<8x4xf32> to vector<8x1xf32>
    %25 = vector.extract_strided_slice %6 {offsets = [3, 0], sizes = [1, 128], strides = [1, 1]} : vector<4x128xf32> to vector<1x128xf32>
    %26 = vector.broadcast %24 : vector<8x1xf32> to vector<8x128xf32>
    %27 = vector.broadcast %25 : vector<1x128xf32> to vector<8x128xf32>
    %28 = arith.mulf %26, %27 : vector<8x128xf32>
    %29 = arith.addf %23, %28 : vector<8x128xf32>
    %30 = arith.addf %3, %29 : vector<8x128xf32>
    %c0_9 = arith.constant 0 : index
    %c0_10 = arith.constant 0 : index
    %31 = vector.load %arg6[%c0_9, %c0_10] : memref<8x1xf32, #tpu.memory_space<vmem>>, vector<8x1xf32>
    %32 = vector.broadcast %31 : vector<8x1xf32> to vector<8x128xf32>
    %33 = arith.mulf %30, %32 : vector<8x128xf32>
    %c0_11 = arith.constant 0 : index
    %c0_12 = arith.constant 0 : index
    %34 = vector.load %arg7[%c0_11, %c0_12] : memref<8x1xf32, #tpu.memory_space<vmem>>, vector<8x1xf32>
    %35 = vector.broadcast %34 : vector<8x1xf32> to vector<8x128xf32>
    %36 = arith.addf %33, %35 : vector<8x128xf32>
    %c0_13 = arith.constant 0 : index
    %c0_14 = arith.constant 0 : index
    %c0_15 = arith.constant 0 : index
    %37 = vector.load %arg2[%c0_13, %c0_14, %c0_15] : memref<1x8x128xf32, #tpu.memory_space<vmem>>, vector<1x8x128xf32>
    %38 = vector.shape_cast %37 : vector<1x8x128xf32> to vector<8x128xf32>
    %39 = arith.addf %36, %38 : vector<8x128xf32>
    %cst_16 = arith.constant 0.000000e+00 : f32
    %40 = vector.broadcast %cst_16 : f32 to vector<8x128xf32>
    %41 = arith.maximumf %39, %40 : vector<8x128xf32>
    %c0_17 = arith.constant 0 : index
    %c0_18 = arith.constant 0 : index
    %c0_19 = arith.constant 0 : index
    %42 = vector.load %arg8[%c0_17, %c0_18, %c0_19] : memref<1x8x128xf32, #tpu.memory_space<vmem>>, vector<1x8x128xf32>
    %43 = vector.shape_cast %42 : vector<1x8x128xf32> to vector<8x128xf32>
    %44 = vector.shape_cast %41 : vector<8x128xf32> to vector<1x8x128xf32>
    tpu.vector_store %arg8[%c0_17, %c0_18, %c0_19], %44 {strides = array<i32>} : memref<1x8x128xf32, #tpu.memory_space<vmem>>, vector<1x8x128xf32>,
    return
  }
  func.func @transform_0(%arg0: i32, %arg1: i32) -> (i32, i32, i32) {
    %c0_i32 = arith.constant 0 : i32
    %c0_i32_0 = arith.constant 0 : i32
    return %arg0, %c0_i32, %arg1 : i32, i32, i32
  }
  func.func @transform_1(%arg0: i32, %arg1: i32) -> (i32, i32, i32) {
    %c0_i32 = arith.constant 0 : i32
    %c0_i32_0 = arith.constant 0 : i32
    return %arg0, %c0_i32, %arg1 : i32, i32, i32
  }
  func.func @transform_2(%arg0: i32, %arg1: i32) -> (i32, i32) {
    %c0_i32 = arith.constant 0 : i32
    %c0_i32_0 = arith.constant 0 : i32
    %c0_i32_1 = arith.constant 0 : i32
    return %c0_i32, %c0_i32_0 : i32, i32
  }
  func.func @transform_3(%arg0: i32, %arg1: i32) -> (i32, i32) {
    %c0_i32 = arith.constant 0 : i32
    %c0_i32_0 = arith.constant 0 : i32
    %c0_i32_1 = arith.constant 0 : i32
    return %c0_i32, %c0_i32_0 : i32, i32
  }
  func.func @transform_4(%arg0: i32, %arg1: i32) -> (i32, i32) {
    %c0_i32 = arith.constant 0 : i32
    %c0_i32_0 = arith.constant 0 : i32
    %c0_i32_1 = arith.constant 0 : i32
    return %c0_i32, %c0_i32_0 : i32, i32
  }
  func.func @transform_5(%arg0: i32, %arg1: i32) -> (i32, i32) {
    %c0_i32 = arith.constant 0 : i32
    %c0_i32_0 = arith.constant 0 : i32
    %c0_i32_1 = arith.constant 0 : i32
    return %c0_i32, %c0_i32_0 : i32, i32
  }
  func.func @transform_6(%arg0: i32, %arg1: i32) -> (i32, i32, i32) {
    %c0_i32 = arith.constant 0 : i32
    %c0_i32_0 = arith.constant 0 : i32
    return %arg0, %c0_i32, %arg1 : i32, i32, i32
  }
}

</mosaic_0001>

<llo_original>
// kernel: tpu_custom_call.1
$region0: #{tpu_custom_call.1}
  #allocation0 [shape = 'u32[]', space=smem, size = 0x4, offset = 0x4, fixed_abs, tag = 'smem constant byte address 0x4 - core index']
  #allocation1 [shape = 'u32[144,128]{1,0:T(1,128)}', space=vmem, size = 0x12000, scoped, tag = 'internal scratch']
  %s0 = inlined_call_operand.hbm [shape: f32[2,8,400], index: 0, kind: input, shape index: {}]
  %s1 = inlined_call_operand.vmem [shape: f32[2,4,400], index: 1, kind: input, shape index: {}]
  %s2 = inlined_call_operand.hbm [shape: f32[8,8], index: 2, kind: input, shape index: {}]
  %s3 = inlined_call_operand.vmem [shape: f32[8,4], index: 3, kind: input, shape index: {}]
  %s4 = inlined_call_operand.vmem [shape: f32[8,1], index: 4, kind: input, shape index: {}]
  %s5 = inlined_call_operand.vmem [shape: f32[8,1], index: 5, kind: input, shape index: {}]
  %s6 = inlined_call_operand.hbm [shape: f32[2,8,400], index: 6, kind: output, shape index: {}]
  %s7 = sld [smem:[#allocation0]]
  $region65: #{tpu_custom_call.1} parent=0
    _
  %s9 = ssub.s32 1, %s7
  %s10 = scalar_select 0, %s9, %s7
  $region1: #{tpu_custom_call.1} parent=0
    #allocation2 [shape = 'u8[8192]{0}', space=vmem, size = 0x2000, scoped, tag = 'input window, operand 0']
    #allocation3 [shape = 's32[2]{0}', space=sflag, size = 0x8, scoped, tag = 'scoped memory for tpu_custom_call.1']
    #allocation4 [shape = 's32[2]{0}', space=sflag, size = 0x8, scoped, tag = 'scoped memory for tpu_custom_call.1']
    #allocation5 [shape = 'u8[4096]{0}', space=vmem, size = 0x1000, scoped, tag = 'input window, operand 2, single buffered']
    #allocation6 [shape = 's32[1]{0}', space=sflag, size = 0x4, scoped, tag = 'scoped memory for tpu_custom_call.1']
    #allocation7 [shape = 'u8[8192]{0}', space=vmem, size = 0x2000, scoped, tag = 'output window, operand 0']
    %11 = vsyncpa [#allocation3], 0
    %s12 = scalar_lea.sflag [#allocation3], 1
    %13 = vsyncpa %s12, 0
    %14 = vsyncpa [#allocation6], 0
    %15 = vsyncpa [#allocation4], 0
    %s16 = scalar_lea.sflag [#allocation4], 1
    %17 = vsyncpa %s16, 0
    loop: start=0, step=1, limit=10
    $region2: #{tpu_custom_call.1} parent=1 // loop_pre_header
      _
    $region3: #{tpu_custom_call.1} parent=1 // loop_header
      %s19 = sphi 0, %s23
      %p20 = scmp.ge.s32.totalorder %s19, 10
      %s26 = sphi 0, %s38
      %s27 = sphi 0, %s34
      %s28 = sphi 0, %s26
      %s29 = sphi 0, %s27
      %s30 = sphi 0, %s28
      %s31 = sphi 0, %s29
      %s43 = sphi 0, %s45
      %s46 = sphi 0, %s43
      %s47 = sphi 0, %s46
      %s63 = sphi 0, %s47
      %s71 = sphi 0, %s73
      %s74 = sphi 0, %s71
      %s75 = sphi 0, %s74
      %s91 = sphi 0, %s75
      %s95 = sphi 0, %s95
      %s97 = sphi 0, %s95
      %s98 = sphi 0, %s97
      %s112 = sphi 0, %s98
      %s116 = sphi 0, %s116
      %s118 = sphi 0, %s116
      %s119 = sphi 0, %s118
      %s133 = sphi 0, %s119
      %s137 = sphi 0, %s137
      %s139 = sphi 0, %s137
      %s140 = sphi 0, %s139
      %s154 = sphi 0, %s140
      %s158 = sphi 0, %s158
      %s160 = sphi 0, %s158
      %s161 = sphi 0, %s160
      %s175 = sphi 0, %s161
      %s183 = sphi 0, %s185
      %s186 = sphi 0, %s183
      %s187 = sphi 0, %s186
      %s203 = sphi 0, %s187
    $region4: #{tpu_custom_call.1} parent=1 // loop_header_branch
      %22 = sbr.rel (%p20) target = $region8
    $region5: #{tpu_custom_call.1} parent=1 // loop_body
      %s24 = ssub.s32 %s19, 1
      %s25 = ssub.s32 %s19, 2
      %s32 = sadd.s32 1, %s27
      %p33 = scmp.ge.s32.totalorder %s32, 4
      %s34 = scalar_select %p33, 0, %s32
      %s35 = sadd.s32 1, %s26
      %s36 = scalar_select %p33, %s35, %s26
      %p37 = scmp.ge.s32.totalorder %s36, 2
      %s38 = scalar_select %p37, 0, %s36
      %s39 = ssub.s32 %s26, %s38
      %s40 = ssub.s32 %s27, %s34
      %s41 = sor.u32 %s39, %s40
      %p42 = scmp.eq.s32.totalorder %s41, 0
      %s44 = sadd.s32 %s43, 1
      %s45 = scalar_select %p42, %s43, %s44
      %p48 = pneg %p42
      %p49 = scmp.eq.s32.totalorder %s19, 7
      %p50 = por %p48, %p49
      %p51 = scmp.ne.s32.totalorder %s43, %s46
      %p52 = scmp.eq.s32.totalorder %s19, 0
      %p53 = por %p51, %p52
      %p54 = scmp.ne.s32.totalorder %s43, %s46
      %p55 = scmp.eq.s32.totalorder %s24, 7
      %p56 = por %p54, %p55
      %p57 = scmp.ne.s32.totalorder %s46, %s47
      %p58 = scmp.eq.s32.totalorder %s24, 0
      %p59 = por %p57, %p58
      %p60 = scmp.ne.s32.totalorder %s46, %s47
      %p61 = scmp.eq.s32.totalorder %s25, 7
      %p62 = por %p60, %p61
      %p64 = scmp.ne.s32.totalorder %s47, %s63
      %p65 = scmp.eq.s32.totalorder %s25, 0
      %p66 = por %p64, %p65
      %s67 = ssub.s32 %s26, %s38
      %s68 = ssub.s32 %s27, %s34
      %s69 = sor.u32 %s67, %s68
      %p70 = scmp.eq.s32.totalorder %s69, 0
      %s72 = sadd.s32 %s71, 1
      %s73 = scalar_select %p70, %s71, %s72
      %p76 = pneg %p70
      %p77 = scmp.eq.s32.totalorder %s19, 7
      %p78 = por %p76, %p77
      %p79 = scmp.ne.s32.totalorder %s71, %s74
      %p80 = scmp.eq.s32.totalorder %s19, 0
      %p81 = por %p79, %p80
      %p82 = scmp.ne.s32.totalorder %s71, %s74
      %p83 = scmp.eq.s32.totalorder %s24, 7
      %p84 = por %p82, %p83
      %p85 = scmp.ne.s32.totalorder %s74, %s75
      %p86 = scmp.eq.s32.totalorder %s24, 0
      %p87 = por %p85, %p86
      %p88 = scmp.ne.s32.totalorder %s74, %s75
      %p89 = scmp.eq.s32.totalorder %s25, 7
      %p90 = por %p88, %p89
      %p92 = scmp.ne.s32.totalorder %s75, %s91
      %p93 = scmp.eq.s32.totalorder %s25, 0
      %p94 = por %p92, %p93
      %s96 = sadd.s32 %s95, 1
      %p99 = scmp.eq.s32.totalorder %s19, 7
      %p100 = scmp.ne.s32.totalorder %s95, %s97
      %p101 = scmp.eq.s32.totalorder %s19, 0
      %p102 = por %p100, %p101
      %p103 = scmp.ne.s32.totalorder %s95, %s97
      %p104 = scmp.eq.s32.totalorder %s24, 7
      %p105 = por %p103, %p104
      %p106 = scmp.ne.s32.totalorder %s97, %s98
      %p107 = scmp.eq.s32.totalorder %s24, 0
      %p108 = por %p106, %p107
      %p109 = scmp.ne.s32.totalorder %s97, %s98
      %p110 = scmp.eq.s32.totalorder %s25, 7
      %p111 = por %p109, %p110
      %p113 = scmp.ne.s32.totalorder %s98, %s112
      %p114 = scmp.eq.s32.totalorder %s25, 0
      %p115 = por %p113, %p114
      %s117 = sadd.s32 %s116, 1
      %p120 = scmp.eq.s32.totalorder %s19, 7
      %p121 = scmp.ne.s32.totalorder %s116, %s118
      %p122 = scmp.eq.s32.totalorder %s19, 0
      %p123 = por %p121, %p122
      %p124 = scmp.ne.s32.totalorder %s116, %s118
      %p125 = scmp.eq.s32.totalorder %s24, 7
      %p126 = por %p124, %p125
      %p127 = scmp.ne.s32.totalorder %s118, %s119
      %p128 = scmp.eq.s32.totalorder %s24, 0
      %p129 = por %p127, %p128
      %p130 = scmp.ne.s32.totalorder %s118, %s119
      %p131 = scmp.eq.s32.totalorder %s25, 7
      %p132 = por %p130, %p131
      %p134 = scmp.ne.s32.totalorder %s119, %s133
      %p135 = scmp.eq.s32.totalorder %s25, 0
      %p136 = por %p134, %p135
      %s138 = sadd.s32 %s137, 1
      %p141 = scmp.eq.s32.totalorder %s19, 7
      %p142 = scmp.ne.s32.totalorder %s137, %s139
      %p143 = scmp.eq.s32.totalorder %s19, 0
      %p144 = por %p142, %p143
      %p145 = scmp.ne.s32.totalorder %s137, %s139
      %p146 = scmp.eq.s32.totalorder %s24, 7
      %p147 = por %p145, %p146
      %p148 = scmp.ne.s32.totalorder %s139, %s140
      %p149 = scmp.eq.s32.totalorder %s24, 0
      %p150 = por %p148, %p149
      %p151 = scmp.ne.s32.totalorder %s139, %s140
      %p152 = scmp.eq.s32.totalorder %s25, 7
      %p153 = por %p151, %p152
      %p155 = scmp.ne.s32.totalorder %s140, %s154
      %p156 = scmp.eq.s32.totalorder %s25, 0
      %p157 = por %p155, %p156
      %s159 = sadd.s32 %s158, 1
      %p162 = scmp.eq.s32.totalorder %s19, 7
      %p163 = scmp.ne.s32.totalorder %s158, %s160
      %p164 = scmp.eq.s32.totalorder %s19, 0
      %p165 = por %p163, %p164
      %p166 = scmp.ne.s32.totalorder %s158, %s160
      %p167 = scmp.eq.s32.totalorder %s24, 7
      %p168 = por %p166, %p167
      %p169 = scmp.ne.s32.totalorder %s160, %s161
      %p170 = scmp.eq.s32.totalorder %s24, 0
      %p171 = por %p169, %p170
      %p172 = scmp.ne.s32.totalorder %s160, %s161
      %p173 = scmp.eq.s32.totalorder %s25, 7
      %p174 = por %p172, %p173
      %p176 = scmp.ne.s32.totalorder %s161, %s175
      %p177 = scmp.eq.s32.totalorder %s25, 0
      %p178 = por %p176, %p177
      %s179 = ssub.s32 %s26, %s38
      %s180 = ssub.s32 %s27, %s34
      %s181 = sor.u32 %s179, %s180
      %p182 = scmp.eq.s32.totalorder %s181, 0
      %s184 = sadd.s32 %s183, 1
      %s185 = scalar_select %p182, %s183, %s184
      %p188 = pneg %p182
      %p189 = scmp.eq.s32.totalorder %s19, 7
      %p190 = por %p188, %p189
      %p191 = scmp.ne.s32.totalorder %s183, %s186
      %p192 = scmp.eq.s32.totalorder %s19, 0
      %p193 = por %p191, %p192
      %p194 = scmp.ne.s32.totalorder %s183, %s186
      %p195 = scmp.eq.s32.totalorder %s24, 7
      %p196 = por %p194, %p195
      %p197 = scmp.ne.s32.totalorder %s186, %s187
      %p198 = scmp.eq.s32.totalorder %s24, 0
      %p199 = por %p197, %p198
      %p200 = scmp.ne.s32.totalorder %s186, %s187
      %p201 = scmp.eq.s32.totalorder %s25, 7
      %p202 = por %p200, %p201
      %p204 = scmp.ne.s32.totalorder %s187, %s203
      %p205 = scmp.eq.s32.totalorder %s25, 0
      %p206 = por %p204, %p205
      %p207 = scmp.le.s32.totalorder 1, %s19
      %p208 = scmp.lt.s32.totalorder %s19, 9
      %p209 = pnand %p207, %p208
      %p210 = pneg %p209
      // Predicated region
      $region9: #{tpu_custom_call.1} parent=5 // pred_check
        _
      $region10: #{tpu_custom_call.1} parent=5 // pred_check_branch
        %212 = sbr.rel (%p209) target = $region12
      $region11: #{tpu_custom_call.1} parent=5 // pred_region
        %s213 = ssub.s32 %s19, 1
        // Predicated region
        $region13: #{tpu_custom_call.1} parent=11 // pred_check
          %p214 = pneg %p108
        $region14: #{tpu_custom_call.1} parent=11 // pred_check_branch
          %216 = sbr.rel (%p214) target = $region16
        $region15: #{tpu_custom_call.1} parent=11 // pred_region
          %s218 = ssub.s32 128, 128
          %219 = vsyncadd [#allocation6], %s218
          %s221 = sshll.u32 [#allocation5], 4
          %s222 = int_to_ptr.vmem [resolvable:$true] %s221
          %224 = dma.hbm_to_vmem [thread:$0]  %s2, 128, %s222, [#allocation6]
        $region16: #{tpu_custom_call.1} parent=11 // pred_fallthru
          _
        // Predicated region
        $region17: #{tpu_custom_call.1} parent=11 // pred_check
          %p225 = pneg %p129
        $region18: #{tpu_custom_call.1} parent=11 // pred_check_branch
          %227 = sbr.rel (%p225) target = $region20
        $region19: #{tpu_custom_call.1} parent=11 // pred_region
          _
        $region20: #{tpu_custom_call.1} parent=11 // pred_fallthru
          _
        // Predicated region
        $region21: #{tpu_custom_call.1} parent=11 // pred_check
          %p228 = pneg %p150
        $region22: #{tpu_custom_call.1} parent=11 // pred_check_branch
          %230 = sbr.rel (%p228) target = $region24
        $region23: #{tpu_custom_call.1} parent=11 // pred_region
          _
        $region24: #{tpu_custom_call.1} parent=11 // pred_fallthru
          _
        // Predicated region
        $region25: #{tpu_custom_call.1} parent=11 // pred_check
          %p231 = pneg %p171
        $region26: #{tpu_custom_call.1} parent=11 // pred_check_branch
          %233 = sbr.rel (%p231) target = $region28
        $region27: #{tpu_custom_call.1} parent=11 // pred_region
          _
        $region28: #{tpu_custom_call.1} parent=11 // pred_fallthru
          _
      $region12: #{tpu_custom_call.1} parent=5 // pred_fallthru
        _
      %p234 = scmp.lt.s32.totalorder %s19, 8
      // Predicated region
      $region29: #{tpu_custom_call.1} parent=5 // pred_check
        %p235 = pneg %p234
      $region30: #{tpu_custom_call.1} parent=5 // pred_check_branch
        %237 = sbr.rel (%p235) target = $region32
      $region31: #{tpu_custom_call.1} parent=5 // pred_region
        // Predicated region
        $region33: #{tpu_custom_call.1} parent=31 // pred_check
          %p238 = pneg %p53
        $region34: #{tpu_custom_call.1} parent=31 // pred_check_branch
          %240 = sbr.rel (%p238) target = $region36
        $region35: #{tpu_custom_call.1} parent=31 // pred_region
          %s241 = sand.u32 %s43, 1
          %s242 = scalar_lea.sflag [#allocation3], %s241
          %s243 = sand.u32 %s43, 1
          %s244 = smul.addr %s243, 8
          %s245 = scalar_lea.vmem [#allocation2], %s244
          %s247 = ssub.s32 128, 128
          %248 = vsyncadd %s242, %s247
          %s249 = smul.addr %s26, 4
          %s250 = sadd.s32 %s27, %s249
          %s251 = smul.addr %s250, 128
          %s252 = scalar_lea.hbm %s0, %s251
          %s254 = sshll.u32 %s245, 4
          %s255 = int_to_ptr.vmem [resolvable:$true] %s254
          %257 = dma.hbm_to_vmem [thread:$0]  %s252, 128, %s255, %s242
        $region36: #{tpu_custom_call.1} parent=31 // pred_fallthru
          _
        // Predicated region
        $region37: #{tpu_custom_call.1} parent=31 // pred_check
          %p258 = pneg %p81
        $region38: #{tpu_custom_call.1} parent=31 // pred_check_branch
          %260 = sbr.rel (%p258) target = $region40
        $region39: #{tpu_custom_call.1} parent=31 // pred_region
          %p261 = scmp.lt.s32.totalorder %s26, 1
          %s262 = scalar_select %p261, %s26, 1
          %p263 = scmp.lt.s32.totalorder %s27, 3
          %s264 = scalar_select %p263, %s27, 3
          %s265 = smul.addr %s262, 4
          %s266 = sadd.s32 %s264, %s265
          %s267 = smul.addr %s266, 4
          %s268 = scalar_lea.vmem %s1, %s267
        $region40: #{tpu_custom_call.1} parent=31 // pred_fallthru
          _
      $region32: #{tpu_custom_call.1} parent=5 // pred_fallthru
        _
      %p269 = scmp.le.s32.totalorder 1, %s19
      %p270 = scmp.lt.s32.totalorder %s19, 9
      %p271 = pnand %p269, %p270
      %p272 = pneg %p271
      // Predicated region
      $region41: #{tpu_custom_call.1} parent=5 // pred_check
        _
      $region42: #{tpu_custom_call.1} parent=5 // pred_check_branch
        %274 = sbr.rel (%p271) target = $region44
      $region43: #{tpu_custom_call.1} parent=5 // pred_region
        %s275 = ssub.s32 %s19, 1
        %s276 = sand.u32 %s46, 1
        %s277 = scalar_lea.sflag [#allocation3], %s276
        %s278 = sand.u32 %s46, 1
        %s279 = smul.addr %s278, 8
        %s280 = scalar_lea.vmem [#allocation2], %s279
        // Predicated region
        $region45: #{tpu_custom_call.1} parent=43 // pred_check
          %p281 = pneg %p59
        $region46: #{tpu_custom_call.1} parent=43 // pred_check_branch
          %283 = sbr.rel (%p281) target = $region48
        $region47: #{tpu_custom_call.1} parent=43 // pred_region
          %284 = dma.done %s277, 128
        $region48: #{tpu_custom_call.1} parent=43 // pred_fallthru
          _
        // Predicated region
        $region49: #{tpu_custom_call.1} parent=43 // pred_check
          %p285 = pneg %p108
        $region50: #{tpu_custom_call.1} parent=43 // pred_check_branch
          %287 = sbr.rel (%p285) target = $region52
        $region51: #{tpu_custom_call.1} parent=43 // pred_region
          %288 = dma.done [#allocation6], 128
        $region52: #{tpu_custom_call.1} parent=43 // pred_fallthru
          _
        %s289 = sand.u32 %s46, 1
        %s290 = scalar_lea.sflag [#allocation3], %s289
        %s291 = sand.u32 %s46, 1
        %s292 = smul.addr %s291, 8
        %s293 = scalar_lea.vmem [#allocation2], %s292
        %p294 = pneg %p59
        %p295 = pneg %p56
        %p296 = scmp.lt.s32.totalorder %s28, 1
        %s297 = scalar_select %p296, %s28, 1
        %p298 = scmp.lt.s32.totalorder %s29, 3
        %s299 = scalar_select %p298, %s29, 3
        %s300 = smul.addr %s297, 4
        %s301 = sadd.s32 %s299, %s300
        %s302 = smul.addr %s301, 4
        %s303 = scalar_lea.vmem %s1, %s302
        %p304 = pneg %p87
        %p305 = pneg %p84
        %p306 = pneg %p108
        %p307 = pneg %p105
        %p308 = pneg %p129
        %p309 = pneg %p126
        %p310 = pneg %p150
        %p311 = pneg %p147
        %p312 = pneg %p171
        %p313 = pneg %p168
        %p314 = pneg %p199
        %p315 = pneg %p196
        %s316 = sand.u32 %s186, 1
        %s317 = scalar_lea.sflag [#allocation4], %s316
        %s318 = sand.u32 %s186, 1
        %s319 = smul.addr %s318, 8
        %s320 = scalar_lea.vmem [#allocation7], %s319
        %p321 = scmp.lt.s32.totalorder %s28, 1
        %s322 = scalar_select %p321, %s28, 1
        %p323 = scmp.lt.s32.totalorder %s29, 3
        %s324 = scalar_select %p323, %s29, 3
        %s325 = smul.addr %s322, 4
        %s326 = sadd.s32 %s324, %s325
        %s327 = smul.addr %s326, 4
        %s328 = scalar_lea.vmem %s1, %s327
        %v329 = vld [vmem:[#allocation5] sm:$0xff]
        %v330 = vld [vmem:[%s280] sm:$0xff]
        %v331 = vld [vmem:[%s3] sm:$0xff]
        %v332 = vld [vmem:[%s328] sm:$0xf]
        %334 = vset.pattern.permute.xlu0 0
        %335 = vperm.xlu0 %334, %v331
        %v336 = vpop.permute.xlu0 %335
        %v338 = vlaneseq
        %v339 = vshrl.u32 %v338, 7
        %v340 = vsub.s32 0, %v339
        %v341 = vrot.slane %v332, %v340
        %v342 = vmul.f32 %v336, %v341
        %343 = vset.pattern.permute.xlu0 1
        %344 = vperm.xlu0 %343, %v331
        %v345 = vpop.permute.xlu0 %344
        %v347 = vlaneseq
        %v348 = vshrl.u32 %v347, 7
        %v349 = vsub.s32 1, %v348
        %v350 = vrot.slane %v332, %v349
        %v351 = vmul.f32 %v345, %v350
        %v352 = vadd.f32 %v342, %v351
        %353 = vset.pattern.permute.xlu0 2
        %354 = vperm.xlu0 %353, %v331
        %v355 = vpop.permute.xlu0 %354
        %v357 = vlaneseq
        %v358 = vshrl.u32 %v357, 7
        %v359 = vsub.s32 2, %v358
        %v360 = vrot.slane %v332, %v359
        %v361 = vmul.f32 %v355, %v360
        %v362 = vadd.f32 %v352, %v361
        %363 = vset.pattern.permute.xlu0 3
        %364 = vperm.xlu0 %363, %v331
        %v365 = vpop.permute.xlu0 %364
        %v367 = vlaneseq
        %v368 = vshrl.u32 %v367, 7
        %v369 = vsub.s32 3, %v368
        %v370 = vrot.slane %v332, %v369
        %v371 = vmul.f32 %v365, %v370
        %v372 = vadd.f32 %v362, %v371
        %vm373 = vcmask 64512
        %v375 = vsel %vm373, %v329, 0
        %377 = vmatprep.subr.mxu0 0.0
        %378 = vmatpush1.msra.mxu0 %v330
        %379 = vmatprep.subr.mxu0 0.0
        %380 = vmatpush1.msra.mxu0 0.0
        %381 = vmatprep.subr.mxu0 0.0
        %382 = vmatpush1.msra.mxu0 0.0
        %383 = vmatprep.subr.mxu0 0.0
        %384 = vmatpush1.msra.mxu0 0.0
        %385 = vmatprep.subr.mxu0 0.0
        %386 = vmatpush1.msra.mxu0 0.0
        %387 = vmatprep.subr.mxu0 0.0
        %388 = vmatpush1.msra.mxu0 0.0
        %389 = vmatprep.subr.mxu0 0.0
        %390 = vmatpush1.msra.mxu0 0.0
        %391 = vmatprep.subr.mxu0 0.0
        %392 = vmatpush1.msra.mxu0 0.0
        %393 = vmatprep.subr.mxu0 0.0
        %394 = vmatpush1.msra.mxu0 0.0
        %395 = vmatprep.subr.mxu0 0.0
        %396 = vmatpush1.msra.mxu0 0.0
        %397 = vmatprep.subr.mxu0 0.0
        %398 = vmatpush1.msra.mxu0 0.0
        %399 = vmatprep.subr.mxu0 0.0
        %400 = vmatpush1.msra.mxu0 0.0
        %401 = vmatprep.subr.mxu0 0.0
        %402 = vmatpush1.msra.mxu0 0.0
        %403 = vmatprep.subr.mxu0 0.0
        %404 = vmatpush1.msra.mxu0 0.0
        %405 = vmatprep.subr.mxu0 0.0
        %406 = vmatpush1.msra.mxu0 0.0
        %407 = vmatprep.subr.mxu0 0.0
        %408 = vmatpush1.msra.mxu0 0.0
        %409 = vmatprep.subr.mxu0 0.0
        %410 = vmatpush1.msra.mxu0 0.0
        %411 = vmatprep.subr.mxu0 0.0
        %412 = vmatpush1.msra.mxu0 0.0
        %413 = vmatprep.subr.mxu0 0.0
        %414 = vmatpush1.msra.mxu0 0.0
        %415 = vmatprep.subr.mxu0 0.0
        %416 = vmatpush1.msra.mxu0 0.0
        %417 = vmatprep.subr.mxu0 0.0
        %418 = vmatpush1.msra.mxu0 0.0
        %419 = vmatprep.subr.mxu0 0.0
        %420 = vmatpush1.msra.mxu0 0.0
        %421 = vmatprep.subr.mxu0 0.0
        %422 = vmatpush1.msra.mxu0 0.0
        %423 = vmatprep.subr.mxu0 0.0
        %424 = vmatpush1.msra.mxu0 0.0
        %425 = vmatprep.subr.mxu0 0.0
        %426 = vmatpush1.msra.mxu0 0.0
        %427 = vmatprep.subr.mxu0 0.0
        %428 = vmatpush1.msra.mxu0 0.0
        %429 = vmatprep.subr.mxu0 0.0
        %430 = vmatpush1.msra.mxu0 0.0
        %431 = vmatprep.subr.mxu0 0.0
        %432 = vmatpush1.msra.mxu0 0.0
        %433 = vmatprep.subr.mxu0 0.0
        %434 = vmatpush1.msra.mxu0 0.0
        %435 = vmatprep.subr.mxu0 0.0
        %436 = vmatpush1.msra.mxu0 0.0
        %437 = vmatprep.subr.mxu0 0.0
        %438 = vmatpush1.msra.mxu0 0.0
        %439 = vmatprep.subr.mxu0 0.0
        %440 = vmatpush1.msra.mxu0 0.0
        %441 = vmatprep.mubr.f32.mxu0 0.0
        %442 = vmatmul.mubr.f32.gmra.mrb[0].mxu0 %v375
        %v443 = vpop.f32.mrb[0].mxu0
        %v444 = vadd.f32 %v372, %v443
        %v445 = vpop.f32.mrb[0].mxu0
        %446 = vdwg.mxu0
        %v447 = vld [vmem:[%s4] sm:$0xff]
        %449 = vset.pattern.permute.xlu0 0
        %450 = vperm.xlu0 %449, %v447
        %v451 = vpop.permute.xlu0 %450
        %v453 = vmul.f32 %v444, %v451
        %v454 = vld [vmem:[%s5] sm:$0xff]
        %456 = vset.pattern.permute.xlu0 0
        %457 = vperm.xlu0 %456, %v454
        %v458 = vpop.permute.xlu0 %457
        %v460 = vadd.f32 %v453, %v458
        %v461 = vadd.f32 %v460, %v330
        %v462 = vmax.f32 %v461, 0.0
        %463 = vst [vmem:[%s320] sm:$0xff] %v462
        %s464 = sand.u32 %s186, 1
        %s465 = scalar_lea.sflag [#allocation4], %s464
        %s466 = sand.u32 %s186, 1
        %s467 = smul.addr %s466, 8
        %s468 = scalar_lea.vmem [#allocation7], %s467
        // Predicated region
        $region53: #{tpu_custom_call.1} parent=43 // pred_check
          %p469 = pneg %p196
        $region54: #{tpu_custom_call.1} parent=43 // pred_check_branch
          %471 = sbr.rel (%p469) target = $region56
        $region55: #{tpu_custom_call.1} parent=43 // pred_region
          %s473 = ssub.s32 128, 128
          %474 = vsyncadd %s465, %s473
          %s475 = smul.addr %s28, 4
          %s476 = sadd.s32 %s29, %s475
          %s477 = smul.addr %s476, 128
          %s478 = scalar_lea.hbm %s6, %s477
          %s480 = sshll.u32 %s468, 4
          %s481 = int_to_ptr.vmem [resolvable:$true] %s480
          %483 = dma.vmem_to_hbm [thread:$0]  %s481, 128, %s478, %s465
        $region56: #{tpu_custom_call.1} parent=43 // pred_fallthru
          _
      $region44: #{tpu_custom_call.1} parent=5 // pred_fallthru
        _
      %p484 = scmp.le.s32.totalorder 2, %s19
      // Predicated region
      $region57: #{tpu_custom_call.1} parent=5 // pred_check
        %p485 = pneg %p484
      $region58: #{tpu_custom_call.1} parent=5 // pred_check_branch
        %487 = sbr.rel (%p485) target = $region60
      $region59: #{tpu_custom_call.1} parent=5 // pred_region
        %s488 = ssub.s32 %s19, 2
        // Predicated region
        $region61: #{tpu_custom_call.1} parent=59 // pred_check
          %p489 = pneg %p202
        $region62: #{tpu_custom_call.1} parent=59 // pred_check_branch
          %491 = sbr.rel (%p489) target = $region64
        $region63: #{tpu_custom_call.1} parent=59 // pred_region
          %s492 = sand.u32 %s187, 1
          %s493 = scalar_lea.sflag [#allocation4], %s492
          %s494 = sand.u32 %s187, 1
          %s495 = smul.addr %s494, 8
          %s496 = scalar_lea.vmem [#allocation7], %s495
          %497 = dma.done %s493, 128
        $region64: #{tpu_custom_call.1} parent=59 // pred_fallthru
          _
      $region60: #{tpu_custom_call.1} parent=5 // pred_fallthru
        _
    $region6: #{tpu_custom_call.1} parent=1 // loop_footer
      %s23 = sadd.s32 1, %s19
    $region7: #{tpu_custom_call.1} parent=1 // loop_footer_branch
      %18 = sbr.rel target = $region3
    $region8: #{tpu_custom_call.1} parent=1 // loop_exit
      _
    %498 = vsyncpa [#allocation3], 1
    %s499 = scalar_lea.sflag [#allocation3], 1
    %500 = vsyncpa %s499, 1
    %501 = vsyncpa [#allocation6], 1
    %502 = vsyncpa [#allocation4], 1
    %s503 = scalar_lea.sflag [#allocation4], 1
    %504 = vsyncpa %s503, 1

</llo_original>
